<compile_context>
chip_gen: v5e
topology: v5e:2x2
jax: 0.10.0
libtpu: 0.0.40
codegen_flags: <defaults>
</compile_context>

<pallas_src>
import functools

import jax
import jax.numpy as jnp
from jax.experimental import pallas as pl
from jax.experimental.pallas import tpu as pltpu

EPS = 1e-5


# ----------------------------- VMEM budgets ----------------------------------

@functools.lru_cache(maxsize=None)
def _vmem_budgets():
    """(vmem_limit_bytes, per-kernel block budget) for the local TPU generation."""
    vmem_cap = 64 * 1024 * 1024                        # v7x per-TC floor (safe everywhere)
    try:
        cap = getattr(pltpu.get_tpu_info(), "vmem_capacity_bytes", None)
        if cap:
            vmem_cap = int(cap)
    except Exception:                                   # query unavailable: stay conservative
        pass
    limit = min(vmem_cap * 3 // 4, 100 * 1024 * 1024)   # ~48 MiB v7x, ~96 MiB v5e/v6e
    budget = limit * 2 // 3                              # leaves headroom for params/misc
    return int(limit), int(budget)


# ----------------------------- cost models -----------------------------------
# elems = number of x elements in one block.  Costs count double-buffered DMA
# buffers plus the f32 temporaries the kernel body materializes in VMEM.

def _fused_cost(elems, itemsize):
    cost = 4 * elems * itemsize + 4 * elems            # in+out (x2 each) + x*x f32
    if itemsize < 4:
        cost += 8 * elems                               # f32 upcast of x + f32 y
    return cost


def _stats_cost(elems, itemsize):
    cost = 2 * elems * itemsize + 4 * elems             # input only (outputs tiny) + x*x
    if itemsize < 4:
        cost += 4 * elems
    return cost


def _apply_cost(elems, itemsize):
    cost = 4 * elems * itemsize + 4 * elems             # in+out + f32 y
    if itemsize < 4:
        cost += 4 * elems
    return cost


# ----------------------------- tile selection ---------------------------------

def _sublane_multiple(dtype):
    """Dtype-aware sublane packing: 8 for f32, 16 for bf16/f16, 32 for int8/fp8."""
    return max(8, 32 // jnp.dtype(dtype).itemsize)


def _divisor_tiles_desc(extent, mult):
    """Divisors of `extent` that are multiples of `mult`, descending ([extent] fallback)."""
    tiles = [t for t in range(mult, extent + 1, mult) if extent % t == 0]
    if not tiles:
        tiles = [extent]
    return sorted(set(tiles), reverse=True)


def _select_fused_c_tile(reduce_extent, c, mult, itemsize, budget):
    """Largest channel tile whose fused block fits; prefers >= 2 grid tiles (v7x)."""
    tiles = _divisor_tiles_desc(c, mult)
    fitting = [t for t in tiles
               if _fused_cost(reduce_extent * t, itemsize) <= budget]
    if not fitting:
        return None
    multi = [t for t in fitting if c // t >= 2]          # keep both v7x TCs busy
    return multi[0] if multi else fitting[0]


def _select_stream_c_tile(c, mult, cap=512):
    """Modest channel tile for the streaming path (prefers >= 2 grid tiles)."""
    tiles = _divisor_tiles_desc(c, mult)
    pool = [t for t in tiles if t <= cap] or tiles
    multi = [t for t in pool if c // t >= 2]
    return (multi or pool)[0]


def _largest_divisor_fitting(n, cost_fn, budget, mult=1):
    """Largest divisor t of n (multiple of `mult`, or n itself) with cost_fn(t) <= budget."""
    best = None
    for t in range(1, n + 1):
        if n % t:
            continue
        if (t % mult == 0 or t == n) and cost_fn(t) <= budget:
            best = t
    if best is not None:
        return best
    # TODO(synk): add minor-axis (L) chunking when even the smallest legal batch
    # tile exceeds the budget; for now fall back to the smallest legal tile.
    for t in range(1, n + 1):
        if n % t == 0 and (t % mult == 0 or t == n):
            return t
    return n


# ----------------------------- 3D kernels: x is (N, C, L) ----------------------

def _sum_nl(v):
    """(N_t, C_t, L) -> (C_t, 1): reduce over batch (leading) and lane axes."""
    return jnp.sum(jnp.sum(v, axis=0), axis=1, keepdims=True)


def _bn3d_fused_kernel(x_ref, w_ref, b_ref, o_ref):
    xf = x_ref[...].astype(jnp.float32)                  # (N, C_t, L)
    inv_count = 1.0 / (xf.shape[0] * xf.shape[2])
    mean = _sum_nl(xf) * inv_count                        # (C_t, 1)
    var = jnp.maximum(_sum_nl(xf * xf) * inv_count - mean * mean, 0.0)
    scale = w_ref[...] * jax.lax.rsqrt(var + EPS)
    shift = b_ref[...] - mean * scale
    o_ref[...] = (xf * scale + shift).astype(o_ref.dtype)


def _bn3d_stats_kernel(x_ref, w_ref, b_ref, scale_ref, shift_ref, *, inv_count):
    ni = pl.program_id(1)

    @pl.when(ni == 0)
    def _init():
        scale_ref[...] = jnp.zeros_like(scale_ref)        # running sum(x)
        shift_ref[...] = jnp.zeros_like(shift_ref)        # running sum(x^2)

    xf = x_ref[...].astype(jnp.float32)                   # (N_t, C_t, L)
    scale_ref[...] += _sum_nl(xf)
    shift_ref[...] += _sum_nl(xf * xf)

    @pl.when(ni == pl.num_programs(1) - 1)
    def _finalize():
        mean = scale_ref[...] * inv_count
        var = jnp.maximum(shift_ref[...] * inv_count - mean * mean, 0.0)
        scale = w_ref[...] * jax.lax.rsqrt(var + EPS)
        scale_ref[...] = scale
        shift_ref[...] = b_ref[...] - mean * scale


def _bn3d_apply_kernel(x_ref, scale_ref, shift_ref, o_ref):
    xf = x_ref[...].astype(jnp.float32)
    o_ref[...] = (xf * scale_ref[...] + shift_ref[...]).astype(o_ref.dtype)


# ----------------------------- 2D kernels: x is (N, C), C on lanes -------------

def _bn2d_fused_kernel(x_ref, w_ref, b_ref, o_ref):
    xf = x_ref[...].astype(jnp.float32)                   # (N, C_t)
    inv_count = 1.0 / xf.shape[0]
    mean = jnp.sum(xf, axis=0, keepdims=True) * inv_count  # (1, C_t)
    var = jnp.maximum(jnp.sum(xf * xf, axis=0, keepdims=True) * inv_count
                      - mean * mean, 0.0)
    scale = w_ref[...] * jax.lax.rsqrt(var + EPS)
    shift = b_ref[...] - mean * scale
    o_ref[...] = (xf * scale + shift).astype(o_ref.dtype)


def _bn2d_stats_kernel(x_ref, w_ref, b_ref, scale_ref, shift_ref, *, inv_count):
    ni = pl.program_id(1)

    @pl.when(ni == 0)
    def _init():
        scale_ref[...] = jnp.zeros_like(scale_ref)
        shift_ref[...] = jnp.zeros_like(shift_ref)

    xf = x_ref[...].astype(jnp.float32)                   # (N_t, C_t)
    scale_ref[...] += jnp.sum(xf, axis=0, keepdims=True)
    shift_ref[...] += jnp.sum(xf * xf, axis=0, keepdims=True)

    @pl.when(ni == pl.num_programs(1) - 1)
    def _finalize():
        mean = scale_ref[...] * inv_count
        var = jnp.maximum(shift_ref[...] * inv_count - mean * mean, 0.0)
        scale = w_ref[...] * jax.lax.rsqrt(var + EPS)
        scale_ref[...] = scale
        shift_ref[...] = b_ref[...] - mean * scale


def _bn2d_apply_kernel(x_ref, scale_ref, shift_ref, o_ref):
    xf = x_ref[...].astype(jnp.float32)
    o_ref[...] = (xf * scale_ref[...] + shift_ref[...]).astype(o_ref.dtype)


# ----------------------------- wrappers ----------------------------------------

def _batch_norm_3d(x, weight, bias):
    n, c, l = x.shape
    w2 = weight.reshape(c, 1).astype(jnp.float32)
    b2 = bias.reshape(c, 1).astype(jnp.float32)
    itemsize = jnp.dtype(x.dtype).itemsize
    vmem_limit, budget = _vmem_budgets()
    mult = _sublane_multiple(x.dtype)

    # TODO(synk): for small L (< 128) a wrapper-side relayout to (C, N*L) would
    # make the lane axis fully dense; currently L rides on lanes as-is.

    c_tile = _select_fused_c_tile(n * l, c, mult, itemsize, budget)
    if c_tile is not None:
        # One pass over HBM: stats + normalize fused per channel tile.
        num_c = c // c_tile
        return pl.pallas_call(
            _bn3d_fused_kernel,
            out_shape=jax.ShapeDtypeStruct((n, c, l), x.dtype),
            grid=(num_c,),
            in_specs=[
                pl.BlockSpec((n, c_tile, l), lambda ci: (0, ci, 0)),
                pl.BlockSpec((c_tile, 1), lambda ci: (ci, 0)),
                pl.BlockSpec((c_tile, 1), lambda ci: (ci, 0)),
            ],
            out_specs=pl.BlockSpec((n, c_tile, l), lambda ci: (0, ci, 0)),
            compiler_params=pltpu.CompilerParams(
                dimension_semantics=("parallel",),
                vmem_limit_bytes=vmem_limit),
        )(x, w2, b2)

    # Streaming two-pass path: stats over batch chunks, then lane-dense apply.
    c_tile = _select_stream_c_tile(c, mult)
    num_c = c // c_tile
    row_elems = c_tile * l
    n_tile_stats = _largest_divisor_fitting(
        n, lambda t: _stats_cost(t * row_elems, itemsize), budget)
    n_tile_apply = _largest_divisor_fitting(
        n, lambda t: _apply_cost(t * row_elems, itemsize), budget)

    scale, shift = pl.pallas_call(
        functools.partial(_bn3d_stats_kernel, inv_count=1.0 / (n * l)),
        out_shape=(jax.ShapeDtypeStruct((c, 1), jnp.float32),
                   jax.ShapeDtypeStruct((c, 1), jnp.float32)),
        grid=(num_c, n // n_tile_stats),
        in_specs=[
            pl.BlockSpec((n_tile_stats, c_tile, l), lambda ci, ni: (ni, ci, 0)),
            pl.BlockSpec((c_tile, 1), lambda ci, ni: (ci, 0)),
            pl.BlockSpec((c_tile, 1), lambda ci, ni: (ci, 0)),
        ],
        out_specs=(pl.BlockSpec((c_tile, 1), lambda ci, ni: (ci, 0)),
                   pl.BlockSpec((c_tile, 1), lambda ci, ni: (ci, 0))),
        compiler_params=pltpu.CompilerParams(
            dimension_semantics=("parallel", "arbitrary"),
            vmem_limit_bytes=vmem_limit),
    )(x, w2, b2)

    return pl.pallas_call(
        _bn3d_apply_kernel,
        out_shape=jax.ShapeDtypeStruct((n, c, l), x.dtype),
        grid=(num_c, n // n_tile_apply),
        in_specs=[
            pl.BlockSpec((n_tile_apply, c_tile, l), lambda ci, ni: (ni, ci, 0)),
            pl.BlockSpec((c_tile, 1), lambda ci, ni: (ci, 0)),
            pl.BlockSpec((c_tile, 1), lambda ci, ni: (ci, 0)),
        ],
        out_specs=pl.BlockSpec((n_tile_apply, c_tile, l),
                               lambda ci, ni: (ni, ci, 0)),
        compiler_params=pltpu.CompilerParams(
            dimension_semantics=("parallel", "parallel"),
            vmem_limit_bytes=vmem_limit),
    )(x, scale, shift)


def _batch_norm_2d(x, weight, bias):
    n, c = x.shape
    w2 = weight.reshape(1, c).astype(jnp.float32)
    b2 = bias.reshape(1, c).astype(jnp.float32)
    itemsize = jnp.dtype(x.dtype).itemsize
    vmem_limit, budget = _vmem_budgets()

    # Channels live on lanes: tiles are multiples of 128 (or full C).
    c_tile = _select_fused_c_tile(n, c, 128, itemsize, budget)
    if c_tile is not None:
        num_c = c // c_tile
        return pl.pallas_call(
            _bn2d_fused_kernel,
            out_shape=jax.ShapeDtypeStruct((n, c), x.dtype),
            grid=(num_c,),
            in_specs=[
                pl.BlockSpec((n, c_tile), lambda ci: (0, ci)),
                pl.BlockSpec((1, c_tile), lambda ci: (0, ci)),
                pl.BlockSpec((1, c_tile), lambda ci: (0, ci)),
            ],
            out_specs=pl.BlockSpec((n, c_tile), lambda ci: (0, ci)),
            compiler_params=pltpu.CompilerParams(
                dimension_semantics=("parallel",),
                vmem_limit_bytes=vmem_limit),
        )(x, w2, b2)

    # Streaming two-pass over batch chunks (N tile must be a sublane multiple).
    c_tile = _select_stream_c_tile(c, 128, cap=2048)
    num_c = c // c_tile
    n_tile_stats = _largest_divisor_fitting(
        n, lambda t: _stats_cost(t * c_tile, itemsize), budget, mult=8)
    n_tile_apply = _largest_divisor_fitting(
        n, lambda t: _apply_cost(t * c_tile, itemsize), budget, mult=8)

    scale, shift = pl.pallas_call(
        functools.partial(_bn2d_stats_kernel, inv_count=1.0 / n),
        out_shape=(jax.ShapeDtypeStruct((1, c), jnp.float32),
                   jax.ShapeDtypeStruct((1, c), jnp.float32)),
        grid=(num_c, n // n_tile_stats),
        in_specs=[
            pl.BlockSpec((n_tile_stats, c_tile), lambda ci, ni: (ni, ci)),
            pl.BlockSpec((1, c_tile), lambda ci, ni: (0, ci)),
            pl.BlockSpec((1, c_tile), lambda ci, ni: (0, ci)),
        ],
        out_specs=(pl.BlockSpec((1, c_tile), lambda ci, ni: (0, ci)),
                   pl.BlockSpec((1, c_tile), lambda ci, ni: (0, ci))),
        compiler_params=pltpu.CompilerParams(
            dimension_semantics=("parallel", "arbitrary"),
            vmem_limit_bytes=vmem_limit),
    )(x, w2, b2)

    return pl.pallas_call(
        _bn2d_apply_kernel,
        out_shape=jax.ShapeDtypeStruct((n, c), x.dtype),
        grid=(num_c, n // n_tile_apply),
        in_specs=[
            pl.BlockSpec((n_tile_apply, c_tile), lambda ci, ni: (ni, ci)),
            pl.BlockSpec((1, c_tile), lambda ci, ni: (0, ci)),
            pl.BlockSpec((1, c_tile), lambda ci, ni: (0, ci)),
        ],
        out_specs=pl.BlockSpec((n_tile_apply, c_tile), lambda ci, ni: (ni, ci)),
        compiler_params=pltpu.CompilerParams(
            dimension_semantics=("parallel", "parallel"),
            vmem_limit_bytes=vmem_limit),
    )(x, scale, shift)


def batch_norm_1d(x, weight, bias):
    """Training-mode nn.BatchNorm1d forward.  x: (N, C, L) or (N, C)."""
    if x.ndim == 2:
        return _batch_norm_2d(x, weight, bias)
    if x.ndim == 3:
        return _batch_norm_3d(x, weight, bias)
    raise ValueError(f"BatchNorm1d expects 2D or 3D input, got {x.shape}")


# ----------------------------- reference & self-test ---------------------------

def _reference(x, weight, bias):
    if x.ndim == 2:
        axes, shape = (0,), (1, -1)
    else:
        axes, shape = (0, 2), (1, -1, 1)
    xf = x.astype(jnp.float32)
    mean = jnp.mean(xf, axis=axes, keepdims=True)
    var = jnp.mean((xf - mean) ** 2, axis=axes, keepdims=True)
    y = (xf - mean) / jnp.sqrt(var + EPS)
    return (y * weight.reshape(shape) + bias.reshape(shape)).astype(x.dtype)


if __name__ == "__main__":
    key = jax.random.PRNGKey(0)
    k1, k2 = jax.random.split(key)

    # 3D input (N, C, L): the common BatchNorm1d case.
    N, C, L = 2, 4, 16
    x3 = jax.random.normal(k1, (N, C, L), dtype=jnp.float32) * 3.0 + 1.5
    w3 = jnp.ones((C,), dtype=jnp.float32)     # fresh nn.BatchNorm1d defaults
    b3 = jnp.zeros((C,), dtype=jnp.float32)
    out3 = jax.block_until_ready(batch_norm_1d(x3, w3, b3))
    ref3 = _reference(x3, w3, b3)
    assert out3.shape == (N, C, L)
    assert jnp.allclose(out3, ref3, atol=2e-5, rtol=2e-5), "3D mismatch vs reference"

    # 2D input (N, C): exercises the dedicated lane-dense path.
    N2, C2 = 8, 32
    x2 = jax.random.normal(k2, (N2, C2), dtype=jnp.float32) * 2.0 - 0.5
    w2 = jnp.ones((C2,), dtype=jnp.float32)
    b2 = jnp.zeros((C2,), dtype=jnp.float32)
    out2 = jax.block_until_ready(batch_norm_1d(x2, w2, b2))
    ref2 = _reference(x2, w2, b2)
    assert out2.shape == (N2, C2)
    assert jnp.allclose(out2, ref2, atol=2e-5, rtol=2e-5), "2D mismatch vs reference"

    print("KERNEL_OK")
</pallas_src>

<mosaic_0001>
module attributes {stable_mosaic.version = 11 : i64} {
  func.func @_bn3d_fused_kernel(%arg0: i32, %arg1: memref<2x4x16xf32, #tpu.memory_space<vmem>>, %arg2: memref<4x1xf32, #tpu.memory_space<vmem>>, %arg3: memref<4x1xf32, #tpu.memory_space<vmem>>, %arg4: memref<2x4x16xf32, #tpu.memory_space<vmem>>) attributes {dimension_semantics = [#tpu.dimension_semantics<parallel>], iteration_bounds = array<i64: 1>, scalar_prefetch = 0 : i64, scratch_operands = 0 : i64, tpu.core_type = #tpu.core_type<tc>, window_params = [{transform_indices = @transform_0, window_bounds = array<i64: 2, 4, 16>}, {transform_indices = @transform_1, window_bounds = array<i64: 4, 1>}, {transform_indices = @transform_2, window_bounds = array<i64: 4, 1>}, {transform_indices = @transform_3, window_bounds = array<i64: 2, 4, 16>}]} {
    %c0 = arith.constant 0 : index
    %c0_0 = arith.constant 0 : index
    %c0_1 = arith.constant 0 : index
    %0 = vector.load %arg1[%c0, %c0_0, %c0_1] : memref<2x4x16xf32, #tpu.memory_space<vmem>>, vector<2x4x16xf32>
    %cst = arith.constant dense<0.000000e+00> : vector<4x16xf32>
    %1 = vector.multi_reduction <add>, %0, %cst [0] : vector<2x4x16xf32> to vector<4x16xf32>
    %cst_2 = arith.constant dense<0.000000e+00> : vector<4xf32>
    %2 = vector.multi_reduction <add>, %1, %cst_2 [1] : vector<4x16xf32> to vector<4xf32>
    %3 = vector.shape_cast %2 : vector<4xf32> to vector<4x1xf32>
    %cst_3 = arith.constant 3.125000e-02 : f32
    %4 = vector.broadcast %cst_3 : f32 to vector<4x1xf32>
    %5 = arith.mulf %3, %4 : vector<4x1xf32>
    %6 = arith.mulf %0, %0 : vector<2x4x16xf32>
    %cst_4 = arith.constant dense<0.000000e+00> : vector<4x16xf32>
    %7 = vector.multi_reduction <add>, %6, %cst_4 [0] : vector<2x4x16xf32> to vector<4x16xf32>
    %cst_5 = arith.constant dense<0.000000e+00> : vector<4xf32>
    %8 = vector.multi_reduction <add>, %7, %cst_5 [1] : vector<4x16xf32> to vector<4xf32>
    %9 = vector.shape_cast %8 : vector<4xf32> to vector<4x1xf32>
    %cst_6 = arith.constant 3.125000e-02 : f32
    %10 = vector.broadcast %cst_6 : f32 to vector<4x1xf32>
    %11 = arith.mulf %9, %10 : vector<4x1xf32>
    %12 = arith.mulf %5, %5 : vector<4x1xf32>
    %13 = arith.subf %11, %12 : vector<4x1xf32>
    %cst_7 = arith.constant 0.000000e+00 : f32
    %14 = vector.broadcast %cst_7 : f32 to vector<4x1xf32>
    %15 = arith.maximumf %13, %14 : vector<4x1xf32>
    %c0_8 = arith.constant 0 : index
    %c0_9 = arith.constant 0 : index
    %16 = vector.load %arg2[%c0_8, %c0_9] : memref<4x1xf32, #tpu.memory_space<vmem>>, vector<4x1xf32>
    %cst_10 = arith.constant 9.99999974E-6 : f32
    %17 = vector.broadcast %cst_10 : f32 to vector<4x1xf32>
    %18 = arith.addf %15, %17 : vector<4x1xf32>
    %19 = math.rsqrt %18 : vector<4x1xf32>
    %20 = arith.mulf %16, %19 : vector<4x1xf32>
    %c0_11 = arith.constant 0 : index
    %c0_12 = arith.constant 0 : index
    %21 = vector.load %arg3[%c0_11, %c0_12] : memref<4x1xf32, #tpu.memory_space<vmem>>, vector<4x1xf32>
    %22 = arith.mulf %5, %20 : vector<4x1xf32>
    %23 = arith.subf %21, %22 : vector<4x1xf32>
    %24 = vector.shape_cast %20 : vector<4x1xf32> to vector<1x4x1xf32>
    %25 = vector.broadcast %24 : vector<1x4x1xf32> to vector<2x4x16xf32>
    %26 = arith.mulf %0, %25 : vector<2x4x16xf32>
    %27 = vector.shape_cast %23 : vector<4x1xf32> to vector<1x4x1xf32>
    %28 = vector.broadcast %27 : vector<1x4x1xf32> to vector<2x4x16xf32>
    %29 = arith.addf %26, %28 : vector<2x4x16xf32>
    %c0_13 = arith.constant 0 : index
    %c0_14 = arith.constant 0 : index
    %c0_15 = arith.constant 0 : index
    %30 = vector.load %arg4[%c0_13, %c0_14, %c0_15] : memref<2x4x16xf32, #tpu.memory_space<vmem>>, vector<2x4x16xf32>
    tpu.vector_store %arg4[%c0_13, %c0_14, %c0_15], %29 {strides = array<i32>} : memref<2x4x16xf32, #tpu.memory_space<vmem>>, vector<2x4x16xf32>,
    return
  }
  func.func @transform_0(%arg0: i32) -> (i32, i32, i32) {
    %c0_i32 = arith.constant 0 : i32
    %c0_i32_0 = arith.constant 0 : i32
    %c0_i32_1 = arith.constant 0 : i32
    return %c0_i32, %arg0, %c0_i32_0 : i32, i32, i32
  }
  func.func @transform_1(%arg0: i32) -> (i32, i32) {
    %c0_i32 = arith.constant 0 : i32
    %c0_i32_0 = arith.constant 0 : i32
    return %arg0, %c0_i32 : i32, i32
  }
  func.func @transform_2(%arg0: i32) -> (i32, i32) {
    %c0_i32 = arith.constant 0 : i32
    %c0_i32_0 = arith.constant 0 : i32
    return %arg0, %c0_i32 : i32, i32
  }
  func.func @transform_3(%arg0: i32) -> (i32, i32, i32) {
    %c0_i32 = arith.constant 0 : i32
    %c0_i32_0 = arith.constant 0 : i32
    %c0_i32_1 = arith.constant 0 : i32
    return %c0_i32, %arg0, %c0_i32_0 : i32, i32, i32
  }
}

</mosaic_0001>

<llo_original>
// kernel: tpu_custom_call.1
$region0: #{tpu_custom_call.1}
  #allocation0 [shape = 'u32[]', space=smem, size = 0x4, offset = 0x4, fixed_abs, tag = 'smem constant byte address 0x4 - core index']
  #allocation1 [shape = 'u32[72,128]{1,0:T(1,128)}', space=vmem, size = 0x9000, scoped, tag = 'internal scratch']
  %s0 = inlined_call_operand.vmem [shape: f32[2,4,16], index: 0, kind: input, shape index: {}]
  %s1 = inlined_call_operand.vmem [shape: f32[4,1], index: 1, kind: input, shape index: {}]
  %s2 = inlined_call_operand.vmem [shape: f32[4,1], index: 2, kind: input, shape index: {}]
  %s3 = inlined_call_operand.hbm [shape: f32[2,4,16], index: 3, kind: output, shape index: {}]
  %s4 = sld [smem:[#allocation0]]
  $region22: #{tpu_custom_call.1} parent=0
    _
  %s6 = ssub.s32 1, %s4
  %s7 = scalar_select 0, %s6, %s4
  $region1: #{tpu_custom_call.1} parent=0
    #allocation2 [shape = 'u8[4096]{0}', space=vmem, size = 0x1000, scoped, tag = 'output window, operand 0, single buffered']
    #allocation3 [shape = 's32[1]{0}', space=sflag, size = 0x4, scoped, tag = 'scoped memory for tpu_custom_call.1']
    %8 = vsyncpa [#allocation3], 0
    // Predicated region
    $region2: #{tpu_custom_call.1} parent=1 // pred_check
      _
    $region3: #{tpu_custom_call.1} parent=1 // pred_check_branch
      %10 = sbr.rel (0) target = $region5
    $region4: #{tpu_custom_call.1} parent=1 // pred_region
      _
    $region5: #{tpu_custom_call.1} parent=1 // pred_fallthru
      _
    // Predicated region
    $region6: #{tpu_custom_call.1} parent=1 // pred_check
      _
    $region7: #{tpu_custom_call.1} parent=1 // pred_check_branch
      %12 = sbr.rel (0) target = $region9
    $region8: #{tpu_custom_call.1} parent=1 // pred_region
      _
    $region9: #{tpu_custom_call.1} parent=1 // pred_fallthru
      _
    // Predicated region
    $region10: #{tpu_custom_call.1} parent=1 // pred_check
      _
    $region11: #{tpu_custom_call.1} parent=1 // pred_check_branch
      %14 = sbr.rel (0) target = $region13
    $region12: #{tpu_custom_call.1} parent=1 // pred_region
      _
    $region13: #{tpu_custom_call.1} parent=1 // pred_fallthru
      _
    %v15 = vld [vmem:[%s0] sm:$0xf]
    %v16 = vld [vmem:[%s0 + $0x4] sm:$0xf]
    %vm17 = vcmask 125952
    %v18 = vsel %vm17, %v15, 0.0
    %v19 = vsel %vm17, %v16, 0.0
    %v20 = vadd.f32 %v18, %v19
    %v21 = vsel %vm17, %v20, 0.0
    %22 = vadd.xlane.f32.xlu0 %v21
    %v23 = vpop.xlane.xlu0 %22
    %v24 = vmul.f32 %v23, 0.03125
    %v25 = vmul.f32 %v15, %v15
    %v26 = vmul.f32 %v16, %v16
    %v27 = vsel %vm17, %v25, 0.0
    %v28 = vsel %vm17, %v26, 0.0
    %v29 = vadd.f32 %v27, %v28
    %v30 = vsel %vm17, %v29, 0.0
    %31 = vadd.xlane.f32.xlu0 %v30
    %v32 = vpop.xlane.xlu0 %31
    %v33 = vmul.f32 %v32, 0.03125
    %v34 = vmul.f32 %v24, %v24
    %v35 = vsub.f32 %v33, %v34
    %v36 = vmax.f32 %v35, 0.0
    %v37 = vld [vmem:[%s1] sm:$0xf]
    %v38 = vadd.f32 %v36, 1e-05
    %v39 = vrsqrt.pop %v38
    %v40 = vmul.f32 %v39, %v38
    %v41 = vmul.f32 %v40, %v39
    %v42 = vmul.f32 0.5, %v41
    %v43 = vsub.f32 1.5, %v42
    %v44 = vmul.f32 %v39, %v43
    %vm45 = vweird.f32 %v38
    %vm46 = vweird.f32 %v39
    %vm47 = vmor %vm45, %vm46
    %v48 = vsel %vm47, %v39, %v44
    %v49 = vmul.f32 %v37, %v48
    %v50 = vld [vmem:[%s2] sm:$0xf]
    %v51 = vmul.f32 %v24, %v49
    %v52 = vsub.f32 %v50, %v51
    %54 = vset.pattern.permute.xlu0 0
    %55 = vperm.xlu0 %54, %v49
    %v56 = vpop.permute.xlu0 %55
    %v58 = vmul.f32 %v15, %v56
    %v59 = vmul.f32 %v16, %v56
    %61 = vset.pattern.permute.xlu0 0
    %62 = vperm.xlu0 %61, %v52
    %v63 = vpop.permute.xlu0 %62
    %v65 = vadd.f32 %v58, %v63
    %v66 = vadd.f32 %v59, %v63
    %67 = vst.msk [vmem:[#allocation2] sm:$0xf] %vm17, %v65
    %68 = vst.msk [vmem:[#allocation2 + $0x4] sm:$0xf] %vm17, %v66
    // Predicated region
    $region14: #{tpu_custom_call.1} parent=1 // pred_check
      _
    $region15: #{tpu_custom_call.1} parent=1 // pred_check_branch
      %70 = sbr.rel (0) target = $region17
    $region16: #{tpu_custom_call.1} parent=1 // pred_region
      %72 = vsyncadd [#allocation3], 0
      %s73 = sshll.u32 [#allocation2], 4
      %s74 = int_to_ptr.vmem [resolvable:$true] %s73
      %s75 = sshll.u32 %s3, 4
      %s76 = int_to_ptr.hbm [resolvable:$true] %s75
      %81 = dma.vmem_to_hbm [thread:$0]  %s74, 128, %s76, [#allocation3], 64, 64, 4
    $region17: #{tpu_custom_call.1} parent=1 // pred_fallthru
      _
    // Predicated region
    $region18: #{tpu_custom_call.1} parent=1 // pred_check
      _
    $region19: #{tpu_custom_call.1} parent=1 // pred_check_branch
      %83 = sbr.rel (0) target = $region21
    $region20: #{tpu_custom_call.1} parent=1 // pred_region
      %85 = dma.done [#allocation3], 128
    $region21: #{tpu_custom_call.1} parent=1 // pred_fallthru
      _
    %86 = vsyncpa [#allocation3], 1

</llo_original>
